<compile_context>
chip_gen: v7x
topology: tpu7x:2x2x1
jax: 0.10.0
libtpu: 0.0.40
codegen_flags: <defaults>
</compile_context>

<pallas_src>
import functools

import jax
import jax.numpy as jnp
import numpy as np
from jax.experimental import pallas as pl
from jax.experimental.pallas import tpu as pltpu


def _dot(a, b):
    return jnp.dot(a, b, preferred_element_type=jnp.float32)


def _align8(n):
    return ((n + 7) // 8) * 8


def _slab_layout(e, dff):
    """Row offsets of each pre-transposed, bias-augmented weight block."""
    r_qkv = 0                        # (E+1, 3E)    [W_in^T ; b_in]
    r_out = _align8(r_qkv + e + 1)   # (E,   E+1)   [W_out^T | 0]
    r_bout = _align8(r_out + e)      # (1,   E+1)   [b_out   | 0]
    r_ff1 = _align8(r_bout + 1)      # (E+1, dff+1) [W_ff1^T | 0 ; b_ff1 | 1]
    r_ff2 = _align8(r_ff1 + e + 1)   # (dff+1, E)   [W_ff2^T ; b_ff2]
    rows = _align8(r_ff2 + dff + 1)
    cols = max(3 * e, dff + 1, e + 1)
    return r_qkv, r_out, r_bout, r_ff1, r_ff2, rows, cols


def pack_params(p, e, dff):
    """Host-side; call ONCE per parameter set. One f32 slab -> one DMA."""
    r_qkv, r_out, r_bout, r_ff1, r_ff2, rows, cols = _slab_layout(e, dff)
    slab = np.zeros((rows, cols), np.float32)
    slab[r_qkv:r_qkv + e, 0:3 * e] = np.asarray(p["in_proj_w"], np.float32).T
    slab[r_qkv + e, 0:3 * e] = np.asarray(p["in_proj_b"], np.float32)
    slab[r_out:r_out + e, 0:e] = np.asarray(p["out_proj_w"], np.float32).T
    slab[r_bout, 0:e] = np.asarray(p["out_proj_b"], np.float32)
    slab[r_ff1:r_ff1 + e, 0:dff] = np.asarray(p["linear1_w"], np.float32).T
    slab[r_ff1 + e, 0:dff] = np.asarray(p["linear1_b"], np.float32)
    slab[r_ff1 + e, dff] = 1.0          # feeds the ones lane through linear1
    slab[r_ff2:r_ff2 + dff, 0:e] = np.asarray(p["linear2_w"], np.float32).T
    slab[r_ff2 + dff, 0:e] = np.asarray(p["linear2_b"], np.float32)
    return jnp.asarray(slab)


def _make_kernel(bpb, seq, e, dff):
    r_qkv, r_out, r_bout, r_ff1, r_ff2, _, _ = _slab_layout(e, dff)
    m_rows = bpb * seq

    def kernel(x_ref, w_ref, o_ref):
        # static sub-window loads from the single packed parameter slab
        w_qkv = w_ref[r_qkv:r_qkv + e + 1, 0:3 * e]       # (E+1, 3E)
        w_out = w_ref[r_out:r_out + e, 0:e + 1]           # (E, E+1), last col 0
        b_out = w_ref[r_bout:r_bout + 1, 0:e + 1]         # (1, E+1), last elem 0
        w_ff1 = w_ref[r_ff1:r_ff1 + e + 1, 0:dff + 1]     # (E+1, dff+1)
        w_ff2 = w_ref[r_ff2:r_ff2 + dff + 1, 0:e]         # (dff+1, E)

        x_aug = x_ref[...]                                # (M, E+1); lane E == 1

        # fused Q/K/V projection; in_proj bias folded via the ones lane
        qkv = _dot(x_aug, w_qkv)                          # (M, 3E)

        # self-attention: nhead == d_model -> head_dim == 1, scale == 1, so
        # per-head scores are elementwise products with heads on the lane axis.
        qkv_b = qkv.reshape(bpb, seq, 3 * e)
        q = qkv_b[:, :, 0:e]
        k = qkv_b[:, :, e:2 * e]
        v = qkv_b[:, :, 2 * e:3 * e]
        s = q[:, :, None, :] * k[:, None, :, :]           # (bpb, L, L, E)
        m = jnp.max(s, axis=2, keepdims=True)
        p = jnp.exp(s - m)
        denom = jnp.sum(p, axis=2, keepdims=True)
        p = p * pl.reciprocal(denom, approx=True)         # EUP vrcp (own slot)
        attn = jnp.sum(p * v[:, None, :, :], axis=2)      # (bpb, L, E)
        attn = attn.reshape(m_rows, e)

        # residual 1; ones lane preserved (W_out last col == 0, b_out last == 0)
        h_aug = x_aug + _dot(attn, w_out) + b_out         # (M, E+1)

        # feed-forward: LeakyReLU(True) -> slope 1.0 -> identity; Dropout(0) -> identity.
        # linear1 / linear2 biases are folded into the matmuls via the ones lane.
        ff = _dot(h_aug, w_ff1)                           # (M, dff+1)
        ff = _dot(ff, w_ff2)                              # (M, E)
        o_ref[...] = h_aug[:, 0:e] + ff                   # residual 2

    return kernel


@functools.partial(jax.jit, static_argnames=("dff", "bpb"))
def encoder_layer_forward(src, slab, dff=16, bpb=1):
    """src: (L, B, E) float32 (PyTorch layout). slab: pack_params(...). -> (L, B, E)."""
    L, B, E = src.shape
    assert B % bpb == 0, "batch must be divisible by sequences-per-block"
    *_, rows, cols = _slab_layout(E, dff)
    assert slab.shape == (rows, cols), "slab does not match (E, dff) layout"

    # fold batch into the matmul M dimension and append the ones lane (bias folding)
    x = jnp.transpose(src, (1, 0, 2)).reshape(B * L, E).astype(jnp.float32)
    x_aug = jnp.concatenate([x, jnp.ones((B * L, 1), jnp.float32)], axis=1)

    blk = bpb * L
    y2d = pl.pallas_call(
        _make_kernel(bpb, L, E, dff),
        out_shape=jax.ShapeDtypeStruct((B * L, E), jnp.float32),
        grid=(B // bpb,),
        in_specs=[
            pl.BlockSpec((blk, E + 1), lambda i: (i, 0)),
            pl.BlockSpec((rows, cols), lambda i: (0, 0)),   # slab stays resident
        ],
        out_specs=pl.BlockSpec((blk, E), lambda i: (i, 0)),
        compiler_params=pltpu.CompilerParams(
            dimension_semantics=("parallel",),
        ),
    )(x_aug, slab)
    return jnp.transpose(y2d.reshape(B, L, E), (1, 0, 2))


# ----------------------------------------------------------------------------
# pure-JAX reference mirroring the PyTorch module (eval mode)
# ----------------------------------------------------------------------------
def ref_forward(src, p):
    L, B, E = src.shape
    w_in, b_in = p["in_proj_w"], p["in_proj_b"]
    outs = []
    for b in range(B):
        x = src[:, b, :]                                       # (L, E)
        q = x @ w_in[0:E].T + b_in[0:E]
        k = x @ w_in[E:2 * E].T + b_in[E:2 * E]
        v = x @ w_in[2 * E:3 * E].T + b_in[2 * E:3 * E]
        s = q[:, None, :] * k[None, :, :]                      # head_dim == 1, scale 1
        s = s - jnp.max(s, axis=1, keepdims=True)
        ex = jnp.exp(s)
        prob = ex / jnp.sum(ex, axis=1, keepdims=True)
        attn = jnp.sum(prob * v[None, :, :], axis=1)
        x = x + attn @ p["out_proj_w"].T + p["out_proj_b"]
        ff = x @ p["linear1_w"].T + p["linear1_b"]
        ff = jnp.where(ff >= 0.0, ff, 1.0 * ff)                # LeakyReLU(slope=1) == identity
        ff = ff @ p["linear2_w"].T + p["linear2_b"]
        outs.append(x + ff)
    return jnp.stack(outs, axis=1)                             # (L, B, E)


if __name__ == "__main__":
    E = 8        # d_model (= n_feats in TranAD); nhead == d_model -> head_dim == 1
    DFF = 16     # dim_feedforward (module default)
    L = 8        # sequence / window length (sublane-aligned demo shape)
    B = 2        # batch

    key = jax.random.PRNGKey(0)
    ks = jax.random.split(key, 9)
    params = {
        "in_proj_w":  (0.2 * jax.random.normal(ks[0], (3 * E, E))).astype(jnp.float32),
        "in_proj_b":  (0.05 * jax.random.normal(ks[1], (3 * E,))).astype(jnp.float32),
        "out_proj_w": (0.2 * jax.random.normal(ks[2], (E, E))).astype(jnp.float32),
        "out_proj_b": (0.05 * jax.random.normal(ks[3], (E,))).astype(jnp.float32),
        "linear1_w":  (0.2 * jax.random.normal(ks[4], (DFF, E))).astype(jnp.float32),
        "linear1_b":  (0.05 * jax.random.normal(ks[5], (DFF,))).astype(jnp.float32),
        "linear2_w":  (0.2 * jax.random.normal(ks[6], (E, DFF))).astype(jnp.float32),
        "linear2_b":  (0.05 * jax.random.normal(ks[7], (E,))).astype(jnp.float32),
    }
    # PyTorch layout: (L, B, E)
    src = jax.random.normal(ks[8], (L, B, E), dtype=jnp.float32)

    # pack once per parameter set (host side), reuse across forward calls
    slab = pack_params(params, E, DFF)

    out = jax.block_until_ready(encoder_layer_forward(src, slab, dff=DFF, bpb=1))
    ref = jax.block_until_ready(ref_forward(src, params))

    assert out.shape == (L, B, E)
    # tolerance accounts for the approx (EUP) reciprocal in the softmax (~2^-12 rel)
    np.testing.assert_allclose(np.asarray(out), np.asarray(ref), rtol=2e-3, atol=1e-3)
    print("KERNEL_OK")
</pallas_src>

<mosaic_0001>
module attributes {stable_mosaic.version = 11 : i64} {
  func.func @kernel(%arg0: i32, %arg1: memref<8x9xf32, #tpu.memory_space<vmem>>, %arg2: memref<72x24xf32, #tpu.memory_space<vmem>>, %arg3: memref<8x8xf32, #tpu.memory_space<vmem>>) attributes {dimension_semantics = [#tpu.dimension_semantics<parallel>], iteration_bounds = array<i64: 2>, scalar_prefetch = 0 : i64, scratch_operands = 0 : i64, tpu.core_type = #tpu.core_type<tc>, window_params = [{transform_indices = @transform_0, window_bounds = array<i64: 8, 9>}, {pipeline_mode = #tpu.pipeline_mode<synchronous>, transform_indices = @transform_1, window_bounds = array<i64: 72, 24>}, {transform_indices = @transform_2, window_bounds = array<i64: 8, 8>}]} {
    %c0 = arith.constant 0 : index
    %c0_0 = arith.constant 0 : index
    %0 = vector.load %arg2[%c0, %c0_0] : memref<72x24xf32, #tpu.memory_space<vmem>>, vector<9x24xf32>
    %c16 = arith.constant 16 : index
    %c0_1 = arith.constant 0 : index
    %1 = vector.load %arg2[%c16, %c0_1] : memref<72x24xf32, #tpu.memory_space<vmem>>, vector<8x9xf32>
    %c24 = arith.constant 24 : index
    %c0_2 = arith.constant 0 : index
    %2 = vector.load %arg2[%c24, %c0_2] : memref<72x24xf32, #tpu.memory_space<vmem>>, vector<1x9xf32>
    %c32 = arith.constant 32 : index
    %c0_3 = arith.constant 0 : index
    %3 = vector.load %arg2[%c32, %c0_3] : memref<72x24xf32, #tpu.memory_space<vmem>>, vector<9x17xf32>
    %c48 = arith.constant 48 : index
    %c0_4 = arith.constant 0 : index
    %4 = vector.load %arg2[%c48, %c0_4] : memref<72x24xf32, #tpu.memory_space<vmem>>, vector<17x8xf32>
    %c0_5 = arith.constant 0 : index
    %c0_6 = arith.constant 0 : index
    %5 = vector.load %arg1[%c0_5, %c0_6] : memref<8x9xf32, #tpu.memory_space<vmem>>, vector<8x9xf32>
    %cst = arith.constant dense<0.000000e+00> : vector<8x24xf32>
    %6 = tpu.matmul %5, %0, %cst {dimension_numbers = #tpu.dot_dimension_numbers<[1], [0], [0], [1], [0, 0, 1, 1], [], []>} : vector<8x9xf32>, vector<9x24xf32>, vector<8x24xf32> -> vector<8x24xf32>
    %7 = vector.shape_cast %6 : vector<8x24xf32> to vector<1x8x24xf32>
    %8 = vector.extract_strided_slice %7 {offsets = [0, 0, 0], sizes = [1, 8, 8], strides = [1, 1, 1]} : vector<1x8x24xf32> to vector<1x8x8xf32>
    %9 = vector.extract_strided_slice %7 {offsets = [0, 0, 8], sizes = [1, 8, 8], strides = [1, 1, 1]} : vector<1x8x24xf32> to vector<1x8x8xf32>
    %10 = vector.extract_strided_slice %7 {offsets = [0, 0, 16], sizes = [1, 8, 8], strides = [1, 1, 1]} : vector<1x8x24xf32> to vector<1x8x8xf32>
    %11 = vector.shape_cast %8 : vector<1x8x8xf32> to vector<1x8x1x8xf32>
    %12 = vector.shape_cast %9 : vector<1x8x8xf32> to vector<1x1x8x8xf32>
    %13 = vector.broadcast %11 : vector<1x8x1x8xf32> to vector<1x8x8x8xf32>
    %14 = vector.broadcast %12 : vector<1x1x8x8xf32> to vector<1x8x8x8xf32>
    %15 = arith.mulf %13, %14 : vector<1x8x8x8xf32>
    %cst_7 = arith.constant dense<0xFF800000> : vector<1x8x8xf32>
    %16 = vector.multi_reduction <maximumf>, %15, %cst_7 [2] : vector<1x8x8x8xf32> to vector<1x8x8xf32>
    %17 = vector.shape_cast %16 : vector<1x8x8xf32> to vector<1x8x1x8xf32>
    %18 = vector.broadcast %17 : vector<1x8x1x8xf32> to vector<1x8x8x8xf32>
    %19 = arith.subf %15, %18 : vector<1x8x8x8xf32>
    %20 = math.exp %19 : vector<1x8x8x8xf32>
    %cst_8 = arith.constant dense<0.000000e+00> : vector<1x8x8xf32>
    %21 = vector.multi_reduction <add>, %20, %cst_8 [2] : vector<1x8x8x8xf32> to vector<1x8x8xf32>
    %22 = vector.shape_cast %21 : vector<1x8x8xf32> to vector<1x8x1x8xf32>
    %23 = tpu.reciprocal %22 {approx = true} : vector<1x8x1x8xf32> -> vector<1x8x1x8xf32>
    %24 = vector.broadcast %23 : vector<1x8x1x8xf32> to vector<1x8x8x8xf32>
    %25 = arith.mulf %20, %24 : vector<1x8x8x8xf32>
    %26 = vector.shape_cast %10 : vector<1x8x8xf32> to vector<1x1x8x8xf32>
    %27 = vector.broadcast %26 : vector<1x1x8x8xf32> to vector<1x8x8x8xf32>
    %28 = arith.mulf %25, %27 : vector<1x8x8x8xf32>
    %cst_9 = arith.constant dense<0.000000e+00> : vector<1x8x8xf32>
    %29 = vector.multi_reduction <add>, %28, %cst_9 [2] : vector<1x8x8x8xf32> to vector<1x8x8xf32>
    %30 = vector.shape_cast %29 : vector<1x8x8xf32> to vector<8x8xf32>
    %cst_10 = arith.constant dense<0.000000e+00> : vector<8x9xf32>
    %31 = tpu.matmul %30, %1, %cst_10 {dimension_numbers = #tpu.dot_dimension_numbers<[1], [0], [0], [1], [0, 0, 1, 1], [], []>} : vector<8x8xf32>, vector<8x9xf32>, vector<8x9xf32> -> vector<8x9xf32>
    %32 = arith.addf %5, %31 : vector<8x9xf32>
    %33 = vector.broadcast %2 : vector<1x9xf32> to vector<8x9xf32>
    %34 = arith.addf %32, %33 : vector<8x9xf32>
    %cst_11 = arith.constant dense<0.000000e+00> : vector<8x17xf32>
    %35 = tpu.matmul %34, %3, %cst_11 {dimension_numbers = #tpu.dot_dimension_numbers<[1], [0], [0], [1], [0, 0, 1, 1], [], []>} : vector<8x9xf32>, vector<9x17xf32>, vector<8x17xf32> -> vector<8x17xf32>
    %cst_12 = arith.constant dense<0.000000e+00> : vector<8x8xf32>
    %36 = tpu.matmul %35, %4, %cst_12 {dimension_numbers = #tpu.dot_dimension_numbers<[1], [0], [0], [1], [0, 0, 1, 1], [], []>} : vector<8x17xf32>, vector<17x8xf32>, vector<8x8xf32> -> vector<8x8xf32>
    %37 = vector.extract_strided_slice %34 {offsets = [0, 0], sizes = [8, 8], strides = [1, 1]} : vector<8x9xf32> to vector<8x8xf32>
    %38 = arith.addf %37, %36 : vector<8x8xf32>
    %c0_13 = arith.constant 0 : index
    %c0_14 = arith.constant 0 : index
    %39 = vector.load %arg3[%c0_13, %c0_14] : memref<8x8xf32, #tpu.memory_space<vmem>>, vector<8x8xf32>
    tpu.vector_store %arg3[%c0_13, %c0_14], %38 {strides = array<i32>} : memref<8x8xf32, #tpu.memory_space<vmem>>, vector<8x8xf32>,
    return
  }
  func.func @transform_0(%arg0: i32) -> (i32, i32) {
    %c0_i32 = arith.constant 0 : i32
    %c0_i32_0 = arith.constant 0 : i32
    return %arg0, %c0_i32 : i32, i32
  }
  func.func @transform_1(%arg0: i32) -> (i32, i32) {
    %c0_i32 = arith.constant 0 : i32
    %c0_i32_0 = arith.constant 0 : i32
    %c0_i32_1 = arith.constant 0 : i32
    return %c0_i32, %c0_i32_0 : i32, i32
  }
  func.func @transform_2(%arg0: i32) -> (i32, i32) {
    %c0_i32 = arith.constant 0 : i32
    %c0_i32_0 = arith.constant 0 : i32
    return %arg0, %c0_i32 : i32, i32
  }
}

</mosaic_0001>

<llo_original>
// kernel: encoder_layer_forward.1
$region0: #{encoder_layer_forward.1}
  #allocation0 [shape = 'u32[]', space=smem, size = 0x4, offset = 0x4, fixed_abs, tag = 'smem constant byte address 0x4 - core index']
  #allocation1 [shape = 'u32[144,128]{1,0:T(1,128)}', space=vmem, size = 0x12000, scoped, tag = 'internal scratch']
  %s0 = inlined_call_operand.vmem [shape: f32[16,9], index: 0, kind: input, shape index: {}]
  %s1 = inlined_call_operand.vmem [shape: f32[72,24], index: 1, kind: input, shape index: {}]
  %s2 = inlined_call_operand.vmem [shape: f32[16,8], index: 2, kind: output, shape index: {}]
  %s3 = sld [smem:[#allocation0]]
  $region41: #{encoder_layer_forward.1} parent=0
    _
  %s5 = ssub.s32 1, %s3
  %s6 = scalar_select 0, %s5, %s3
  loop: start=0, step=1, limit=4
  $region2: #{encoder_layer_forward.1} parent=0 // loop_pre_header
    _
  $region3: #{encoder_layer_forward.1} parent=0 // loop_header
    %s8 = sphi 0, %s12
    %p9 = scmp.ge.s32.totalorder %s8, 4
    %s18 = sphi 0, %s20
    %s21 = sphi 0, %s18
    %s22 = sphi 0, %s21
    %s38 = sphi 0, %s22
    %s42 = sphi 0, %s42
    %s44 = sphi 0, %s42
    %s45 = sphi 0, %s44
    %s59 = sphi 0, %s45
    %s65 = sphi 0, %s67
    %s68 = sphi 0, %s65
    %s69 = sphi 0, %s68
    %s85 = sphi 0, %s69
  $region4: #{encoder_layer_forward.1} parent=0 // loop_header_branch
    %11 = sbr.rel (%p9) target = $region8
  $region5: #{encoder_layer_forward.1} parent=0 // loop_body
    %s13 = ssub.s32 %s8, 1
    %s14 = ssub.s32 %s8, 2
    %s15 = sadd.s32 %s8, 1
    %s16 = ssub.s32 %s8, %s15
    %p17 = scmp.eq.s32.totalorder %s16, 0
    %s19 = sadd.s32 %s18, 1
    %s20 = scalar_select %p17, %s18, %s19
    %p23 = pneg %p17
    %p24 = scmp.eq.s32.totalorder %s8, 1
    %p25 = por %p23, %p24
    %p26 = scmp.ne.s32.totalorder %s18, %s21
    %p27 = scmp.eq.s32.totalorder %s8, 0
    %p28 = por %p26, %p27
    %p29 = scmp.ne.s32.totalorder %s18, %s21
    %p30 = scmp.eq.s32.totalorder %s13, 1
    %p31 = por %p29, %p30
    %p32 = scmp.ne.s32.totalorder %s21, %s22
    %p33 = scmp.eq.s32.totalorder %s13, 0
    %p34 = por %p32, %p33
    %p35 = scmp.ne.s32.totalorder %s21, %s22
    %p36 = scmp.eq.s32.totalorder %s14, 1
    %p37 = por %p35, %p36
    %p39 = scmp.ne.s32.totalorder %s22, %s38
    %p40 = scmp.eq.s32.totalorder %s14, 0
    %p41 = por %p39, %p40
    %s43 = sadd.s32 %s42, 1
    %p46 = scmp.eq.s32.totalorder %s8, 1
    %p47 = scmp.ne.s32.totalorder %s42, %s44
    %p48 = scmp.eq.s32.totalorder %s8, 0
    %p49 = por %p47, %p48
    %p50 = scmp.ne.s32.totalorder %s42, %s44
    %p51 = scmp.eq.s32.totalorder %s13, 1
    %p52 = por %p50, %p51
    %p53 = scmp.ne.s32.totalorder %s44, %s45
    %p54 = scmp.eq.s32.totalorder %s13, 0
    %p55 = por %p53, %p54
    %p56 = scmp.ne.s32.totalorder %s44, %s45
    %p57 = scmp.eq.s32.totalorder %s14, 1
    %p58 = por %p56, %p57
    %p60 = scmp.ne.s32.totalorder %s45, %s59
    %p61 = scmp.eq.s32.totalorder %s14, 0
    %p62 = por %p60, %p61
    %s63 = ssub.s32 %s8, %s15
    %p64 = scmp.eq.s32.totalorder %s63, 0
    %s66 = sadd.s32 %s65, 1
    %s67 = scalar_select %p64, %s65, %s66
    %p70 = pneg %p64
    %p71 = scmp.eq.s32.totalorder %s8, 1
    %p72 = por %p70, %p71
    %p73 = scmp.ne.s32.totalorder %s65, %s68
    %p74 = scmp.eq.s32.totalorder %s8, 0
    %p75 = por %p73, %p74
    %p76 = scmp.ne.s32.totalorder %s65, %s68
    %p77 = scmp.eq.s32.totalorder %s13, 1
    %p78 = por %p76, %p77
    %p79 = scmp.ne.s32.totalorder %s68, %s69
    %p80 = scmp.eq.s32.totalorder %s13, 0
    %p81 = por %p79, %p80
    %p82 = scmp.ne.s32.totalorder %s68, %s69
    %p83 = scmp.eq.s32.totalorder %s14, 1
    %p84 = por %p82, %p83
    %p86 = scmp.ne.s32.totalorder %s69, %s85
    %p87 = scmp.eq.s32.totalorder %s14, 0
    %p88 = por %p86, %p87
    %p89 = scmp.le.s32.totalorder 1, %s8
    %p90 = scmp.lt.s32.totalorder %s8, 3
    %p91 = pnand %p89, %p90
    %p92 = pneg %p91
    // Predicated region
    $region9: #{encoder_layer_forward.1} parent=5 // pred_check
      _
    $region10: #{encoder_layer_forward.1} parent=5 // pred_check_branch
      %94 = sbr.rel (%p91) target = $region12
    $region11: #{encoder_layer_forward.1} parent=5 // pred_region
      %s95 = ssub.s32 %s8, 1
      // Predicated region
      $region13: #{encoder_layer_forward.1} parent=11 // pred_check
        %p96 = pneg %p55
      $region14: #{encoder_layer_forward.1} parent=11 // pred_check_branch
        %98 = sbr.rel (%p96) target = $region16
      $region15: #{encoder_layer_forward.1} parent=11 // pred_region
        _
      $region16: #{encoder_layer_forward.1} parent=11 // pred_fallthru
        _
    $region12: #{encoder_layer_forward.1} parent=5 // pred_fallthru
      _
    %p99 = scmp.lt.s32.totalorder %s8, 2
    // Predicated region
    $region17: #{encoder_layer_forward.1} parent=5 // pred_check
      %p100 = pneg %p99
    $region18: #{encoder_layer_forward.1} parent=5 // pred_check_branch
      %102 = sbr.rel (%p100) target = $region20
    $region19: #{encoder_layer_forward.1} parent=5 // pred_region
      // Predicated region
      $region21: #{encoder_layer_forward.1} parent=19 // pred_check
        %p103 = pneg %p28
      $region22: #{encoder_layer_forward.1} parent=19 // pred_check_branch
        %105 = sbr.rel (%p103) target = $region24
      $region23: #{encoder_layer_forward.1} parent=19 // pred_region
        %p106 = scmp.lt.s32.totalorder %s8, 1
        %s107 = scalar_select %p106, %s8, 1
        %s108 = smul.addr %s107, 8
        %s109 = scalar_lea.vmem %s0, %s108
      $region24: #{encoder_layer_forward.1} parent=19 // pred_fallthru
        _
    $region20: #{encoder_layer_forward.1} parent=5 // pred_fallthru
      _
    %p110 = scmp.le.s32.totalorder 1, %s8
    %p111 = scmp.lt.s32.totalorder %s8, 3
    %p112 = pnand %p110, %p111
    %p113 = pneg %p112
    // Predicated region
    $region25: #{encoder_layer_forward.1} parent=5 // pred_check
      _
    $region26: #{encoder_layer_forward.1} parent=5 // pred_check_branch
      %115 = sbr.rel (%p112) target = $region28
    $region27: #{encoder_layer_forward.1} parent=5 // pred_region
      %s116 = ssub.s32 %s8, 1
      %p117 = scmp.lt.s32.totalorder %s13, 1
      %s118 = scalar_select %p117, %s13, 1
      %s119 = smul.addr %s118, 8
      %s120 = scalar_lea.vmem %s0, %s119
      %p121 = pneg %p34
      %p122 = pneg %p31
      %p123 = pneg %p55
      %p124 = pneg %p52
      %p125 = pneg %p81
      %p126 = pneg %p78
      %p127 = scmp.lt.s32.totalorder %s13, 1
      %s128 = scalar_select %p127, %s13, 1
      %s129 = smul.addr %s128, 8
      %s130 = scalar_lea.vmem %s2, %s129
      %p131 = scmp.lt.s32.totalorder %s13, 1
      %s132 = scalar_select %p131, %s13, 1
      %s133 = smul.addr %s132, 8
      %s134 = scalar_lea.vmem %s0, %s133
      %p135 = scmp.lt.s32.totalorder %s13, 1
      %s136 = scalar_select %p135, %s13, 1
      %s137 = smul.addr %s136, 8
      %s138 = scalar_lea.vmem %s2, %s137
      %v139 = vld [vmem:[%s1] sm:$0xff]
      %v140 = vld [vmem:[%s1 + $0x8] sm:$0x1]
      %v141 = vld [vmem:[%s1 + $0x10] sm:$0xff]
      %v142 = vld [vmem:[%s1 + $0x18] sm:$0x1]
      %v143 = vld [vmem:[%s1 + $0x20] sm:$0xff]
      %v144 = vld [vmem:[%s1 + $0x28] sm:$0x1]
      %v145 = vld [vmem:[%s1 + $0x30] sm:$0xff]
      %v146 = vld [vmem:[%s1 + $0x38] sm:$0xff]
      %v147 = vld [vmem:[%s1 + $0x40] sm:$0x1]
      %v148 = vld [vmem:[%s134] sm:$0xff]
      %vm149 = vcmask 72704
      %v151 = vsel %vm149, %v148, 0
      %vm153 = vcmask 1040384
      %v155 = vsel %vm153, %v140, 0
      %157 = vmatprep.subr.mxu0 0.0
      %158 = vmatpush1.msra.mxu0 %v139
      %159 = vmatprep.subr.mxu0 0.0
      %160 = vmatpush1.msra.mxu0 %v155
      %161 = vmatprep.subr.mxu0 0.0
      %162 = vmatpush1.msra.mxu0 0.0
      %163 = vmatprep.subr.mxu0 0.0
      %164 = vmatpush1.msra.mxu0 0.0
      %165 = vmatprep.subr.mxu0 0.0
      %166 = vmatpush1.msra.mxu0 0.0
      %167 = vmatprep.subr.mxu0 0.0
      %168 = vmatpush1.msra.mxu0 0.0
      %169 = vmatprep.subr.mxu0 0.0
      %170 = vmatpush1.msra.mxu0 0.0
      %171 = vmatprep.subr.mxu0 0.0
      %172 = vmatpush1.msra.mxu0 0.0
      %173 = vmatprep.subr.mxu0 0.0
      %174 = vmatpush1.msra.mxu0 0.0
      %175 = vmatprep.subr.mxu0 0.0
      %176 = vmatpush1.msra.mxu0 0.0
      %177 = vmatprep.subr.mxu0 0.0
      %178 = vmatpush1.msra.mxu0 0.0
      %179 = vmatprep.subr.mxu0 0.0
      %180 = vmatpush1.msra.mxu0 0.0
      %181 = vmatprep.subr.mxu0 0.0
      %182 = vmatpush1.msra.mxu0 0.0
      %183 = vmatprep.subr.mxu0 0.0
      %184 = vmatpush1.msra.mxu0 0.0
      %185 = vmatprep.subr.mxu0 0.0
      %186 = vmatpush1.msra.mxu0 0.0
      %187 = vmatprep.subr.mxu0 0.0
      %188 = vmatpush1.msra.mxu0 0.0
      %189 = vmatprep.subr.mxu0 0.0
      %190 = vmatpush1.msra.mxu0 0.0
      %191 = vmatprep.subr.mxu0 0.0
      %192 = vmatpush1.msra.mxu0 0.0
      %193 = vmatprep.subr.mxu0 0.0
      %194 = vmatpush1.msra.mxu0 0.0
      %195 = vmatprep.subr.mxu0 0.0
      %196 = vmatpush1.msra.mxu0 0.0
      %197 = vmatprep.subr.mxu0 0.0
      %198 = vmatpush1.msra.mxu0 0.0
      %199 = vmatprep.subr.mxu0 0.0
      %200 = vmatpush1.msra.mxu0 0.0
      %201 = vmatprep.subr.mxu0 0.0
      %202 = vmatpush1.msra.mxu0 0.0
      %203 = vmatprep.subr.mxu0 0.0
      %204 = vmatpush1.msra.mxu0 0.0
      %205 = vmatprep.subr.mxu0 0.0
      %206 = vmatpush1.msra.mxu0 0.0
      %207 = vmatprep.subr.mxu0 0.0
      %208 = vmatpush1.msra.mxu0 0.0
      %209 = vmatprep.subr.mxu0 0.0
      %210 = vmatpush1.msra.mxu0 0.0
      %211 = vmatprep.subr.mxu0 0.0
      %212 = vmatpush1.msra.mxu0 0.0
      %213 = vmatprep.subr.mxu0 0.0
      %214 = vmatpush1.msra.mxu0 0.0
      %215 = vmatprep.subr.mxu0 0.0
      %216 = vmatpush1.msra.mxu0 0.0
      %217 = vmatprep.subr.mxu0 0.0
      %218 = vmatpush1.msra.mxu0 0.0
      %219 = vmatprep.subr.mxu0 0.0
      %220 = vmatpush1.msra.mxu0 0.0
      %221 = vmatprep.mubr.f32.mxu0 0.0
      %222 = vmatmul.mubr.f32.gmra.mrb[0].mxu0 %v151
      %v223 = vpop.f32.mrb[0].mxu0
      %v224 = vadd.f32 0.0, %v223
      %v225 = vpop.f32.mrb[0].mxu0
      %226 = vdwg.mxu0
      %v228 = vcombine.high %v224, %v224
      %v230 = vunpack.c.l.s4 1966171168
      %v231 = vunpack.c.0.s8 %v230
      %v232 = vlaneseq
      %v233 = vshrl.u32 %v232, 7
      %v234 = vsub.s32 %v231, %v233
      %v235 = vrot.slane %v224, %v234
      %v237 = vunpack.c.l.s4 1966171168
      %v238 = vunpack.c.0.s8 %v237
      %v239 = vlaneseq
      %v240 = vshrl.u32 %v239, 7
      %v241 = vsub.s32 %v238, %v240
      %v242 = vrot.slane %v228, %v241
      %v243 = vcombine.high %v235, %v235
      %v244 = vcombine.high %v242, %v242
      %v246 = vunpack.c.l.s4 1966171168
      %v247 = vunpack.c.0.s8 %v246
      %v248 = vlaneseq
      %v249 = vshrl.u32 %v248, 7
      %v250 = vsub.s32 %v247, %v249
      %v251 = vrot.slane %v235, %v250
      %v253 = vunpack.c.l.s4 1966171168
      %v254 = vunpack.c.0.s8 %v253
      %v255 = vlaneseq
      %v256 = vshrl.u32 %v255, 7
      %v257 = vsub.s32 %v254, %v256
      %v258 = vrot.slane %v242, %v257
      %v260 = vunpack.c.l.s4 1966171168
      %v261 = vunpack.c.0.s8 %v260
      %v262 = vlaneseq
      %v263 = vshrl.u32 %v262, 7
      %v264 = vsub.s32 %v261, %v263
      %v265 = vrot.slane %v243, %v264
      %v267 = vunpack.c.l.s4 1966171168
      %v268 = vunpack.c.0.s8 %v267
      %v269 = vlaneseq
      %v270 = vshrl.u32 %v269, 7
      %v271 = vsub.s32 %v268, %v270
      %v272 = vrot.slane %v244, %v271
      %v273 = vcombine.high %v251, %v251
      %v274 = vcombine.high %v258, %v258
      %v275 = vcombine.high %v265, %v265
      %v276 = vcombine.high %v272, %v272
      %v277 = vlaneseq
      %v278 = vshrl.u32 %v277, 7
      %v279 = vsub.s32 0, %v278
      %v280 = vrot.slane %v251, %v279
      %v281 = vlaneseq
      %v282 = vshrl.u32 %v281, 7
      %v283 = vsub.s32 0, %v282
      %v284 = vrot.slane %v265, %v283
      %v285 = vlaneseq
      %v286 = vshrl.u32 %v285, 7
      %v287 = vsub.s32 0, %v286
      %v288 = vrot.slane %v273, %v287
      %v289 = vlaneseq
      %v290 = vshrl.u32 %v289, 7
      %v291 = vsub.s32 0, %v290
      %v292 = vrot.slane %v275, %v291
      %v293 = vlaneseq
      %v294 = vshrl.u32 %v293, 7
      %v295 = vsub.s32 0, %v294
      %v296 = vrot.slane %v258, %v295
      %v297 = vlaneseq
      %v298 = vshrl.u32 %v297, 7
      %v299 = vsub.s32 0, %v298
      %v300 = vrot.slane %v272, %v299
      %v301 = vlaneseq
      %v302 = vshrl.u32 %v301, 7
      %v303 = vsub.s32 0, %v302
      %v304 = vrot.slane %v274, %v303
      %v305 = vlaneseq
      %v306 = vshrl.u32 %v305, 7
      %v307 = vsub.s32 0, %v306
      %v308 = vrot.slane %v276, %v307
      %317 = vrot.lane.b32.xlu0 %v224, 120
      %v318 = vpop.permute.xlu0 %317
      %v320 = vmul.f32 %v280, %v318
      %v321 = vmul.f32 %v284, %v318
      %v322 = vmul.f32 %v288, %v318
      %v323 = vmul.f32 %v292, %v318
      %v324 = vmul.f32 %v296, %v318
      %v325 = vmul.f32 %v300, %v318
      %v326 = vmul.f32 %v304, %v318
      %v327 = vmul.f32 %v308, %v318
      %vm328 = vcmask 64512
      %v329 = vsel %vm328, %v320, -inf
      %v330 = vrot.slane %v329, 4
      %v331 = vmax.f32 %v329, %v330
      %v332 = vrot.slane %v331, 2
      %v333 = vmax.f32 %v331, %v332
      %v334 = vrot.slane %v333, 1
      %v335 = vmax.f32 %v333, %v334
      %v336 = vsel %vm328, %v321, -inf
      %v337 = vrot.slane %v336, 4
      %v338 = vmax.f32 %v336, %v337
      %v339 = vrot.slane %v338, 2
      %v340 = vmax.f32 %v338, %v339
      %v341 = vrot.slane %v340, 1
      %v342 = vmax.f32 %v340, %v341
      %v343 = vsel %vm328, %v322, -inf
      %v344 = vrot.slane %v343, 4
      %v345 = vmax.f32 %v343, %v344
      %v346 = vrot.slane %v345, 2
      %v347 = vmax.f32 %v345, %v346
      %v348 = vrot.slane %v347, 1
      %v349 = vmax.f32 %v347, %v348
      %v350 = vsel %vm328, %v323, -inf
      %v351 = vrot.slane %v350, 4
      %v352 = vmax.f32 %v350, %v351
      %v353 = vrot.slane %v352, 2
      %v354 = vmax.f32 %v352, %v353
      %v355 = vrot.slane %v354, 1
      %v356 = vmax.f32 %v354, %v355
      %v357 = vsel %vm328, %v324, -inf
      %v358 = vrot.slane %v357, 4
      %v359 = vmax.f32 %v357, %v358
      %v360 = vrot.slane %v359, 2
      %v361 = vmax.f32 %v359, %v360
      %v362 = vrot.slane %v361, 1
      %v363 = vmax.f32 %v361, %v362
      %v364 = vsel %vm328, %v325, -inf
      %v365 = vrot.slane %v364, 4
      %v366 = vmax.f32 %v364, %v365
      %v367 = vrot.slane %v366, 2
      %v368 = vmax.f32 %v366, %v367
      %v369 = vrot.slane %v368, 1
      %v370 = vmax.f32 %v368, %v369
      %v371 = vsel %vm328, %v326, -inf
      %v372 = vrot.slane %v371, 4
      %v373 = vmax.f32 %v371, %v372
      %v374 = vrot.slane %v373, 2
      %v375 = vmax.f32 %v373, %v374
      %v376 = vrot.slane %v375, 1
      %v377 = vmax.f32 %v375, %v376
      %v378 = vsel %vm328, %v327, -inf
      %v379 = vrot.slane %v378, 4
      %v380 = vmax.f32 %v378, %v379
      %v381 = vrot.slane %v380, 2
      %v382 = vmax.f32 %v380, %v381
      %v383 = vrot.slane %v382, 1
      %v384 = vmax.f32 %v382, %v383
      %v385 = vsub.f32 %v320, %v335
      %v386 = vsub.f32 %v321, %v342
      %v387 = vsub.f32 %v322, %v349
      %v388 = vsub.f32 %v323, %v356
      %v389 = vsub.f32 %v324, %v363
      %v390 = vsub.f32 %v325, %v370
      %v391 = vsub.f32 %v326, %v377
      %v392 = vsub.f32 %v327, %v384
      %v393 = vmul.f32 %v385, 1.442695
      %v394 = vpow.pop %v393
      %v395 = vmul.f32 %v386, 1.442695
      %v396 = vpow.pop %v395
      %v397 = vmul.f32 %v387, 1.442695
      %v398 = vpow.pop %v397
      %v399 = vmul.f32 %v388, 1.442695
      %v400 = vpow.pop %v399
      %v401 = vmul.f32 %v389, 1.442695
      %v402 = vpow.pop %v401
      %v403 = vmul.f32 %v390, 1.442695
      %v404 = vpow.pop %v403
      %v405 = vmul.f32 %v391, 1.442695
      %v406 = vpow.pop %v405
      %v407 = vmul.f32 %v392, 1.442695
      %v408 = vpow.pop %v407
      %v409 = vsel %vm328, %v394, 0.0
      %v410 = vrot.slane %v409, 4
      %v411 = vadd.f32 %v409, %v410
      %v412 = vrot.slane %v411, 2
      %v413 = vadd.f32 %v411, %v412
      %v414 = vrot.slane %v413, 1
      %v415 = vadd.f32 %v413, %v414
      %v416 = vsel %vm328, %v396, 0.0
      %v417 = vrot.slane %v416, 4
      %v418 = vadd.f32 %v416, %v417
      %v419 = vrot.slane %v418, 2
      %v420 = vadd.f32 %v418, %v419
      %v421 = vrot.slane %v420, 1
      %v422 = vadd.f32 %v420, %v421
      %v423 = vsel %vm328, %v398, 0.0
      %v424 = vrot.slane %v423, 4
      %v425 = vadd.f32 %v423, %v424
      %v426 = vrot.slane %v425, 2
      %v427 = vadd.f32 %v425, %v426
      %v428 = vrot.slane %v427, 1
      %v429 = vadd.f32 %v427, %v428
      %v430 = vsel %vm328, %v400, 0.0
      %v431 = vrot.slane %v430, 4
      %v432 = vadd.f32 %v430, %v431
      %v433 = vrot.slane %v432, 2
      %v434 = vadd.f32 %v432, %v433
      %v435 = vrot.slane %v434, 1
      %v436 = vadd.f32 %v434, %v435
      %v437 = vsel %vm328, %v402, 0.0
      %v438 = vrot.slane %v437, 4
      %v439 = vadd.f32 %v437, %v438
      %v440 = vrot.slane %v439, 2
      %v441 = vadd.f32 %v439, %v440
      %v442 = vrot.slane %v441, 1
      %v443 = vadd.f32 %v441, %v442
      %v444 = vsel %vm328, %v404, 0.0
      %v445 = vrot.slane %v444, 4
      %v446 = vadd.f32 %v444, %v445
      %v447 = vrot.slane %v446, 2
      %v448 = vadd.f32 %v446, %v447
      %v449 = vrot.slane %v448, 1
      %v450 = vadd.f32 %v448, %v449
      %v451 = vsel %vm328, %v406, 0.0
      %v452 = vrot.slane %v451, 4
      %v453 = vadd.f32 %v451, %v452
      %v454 = vrot.slane %v453, 2
      %v455 = vadd.f32 %v453, %v454
      %v456 = vrot.slane %v455, 1
      %v457 = vadd.f32 %v455, %v456
      %v458 = vsel %vm328, %v408, 0.0
      %v459 = vrot.slane %v458, 4
      %v460 = vadd.f32 %v458, %v459
      %v461 = vrot.slane %v460, 2
      %v462 = vadd.f32 %v460, %v461
      %v463 = vrot.slane %v462, 1
      %v464 = vadd.f32 %v462, %v463
      %v465 = vrcp.pop %v415
      %v466 = vrcp.pop %v422
      %v467 = vrcp.pop %v429
      %v468 = vrcp.pop %v436
      %v469 = vrcp.pop %v443
      %v470 = vrcp.pop %v450
      %v471 = vrcp.pop %v457
      %v472 = vrcp.pop %v464
      %v473 = vmul.f32 %v394, %v465
      %v474 = vmul.f32 %v396, %v466
      %v475 = vmul.f32 %v398, %v467
      %v476 = vmul.f32 %v400, %v468
      %v477 = vmul.f32 %v402, %v469
      %v478 = vmul.f32 %v404, %v470
      %v479 = vmul.f32 %v406, %v471
      %v480 = vmul.f32 %v408, %v472
      %481 = vrot.lane.b32.xlu0 %v224, 112
      %v482 = vpop.permute.xlu0 %481
      %v484 = vmul.f32 %v473, %v482
      %v485 = vmul.f32 %v474, %v482
      %v486 = vmul.f32 %v475, %v482
      %v487 = vmul.f32 %v476, %v482
      %v488 = vmul.f32 %v477, %v482
      %v489 = vmul.f32 %v478, %v482
      %v490 = vmul.f32 %v479, %v482
      %v491 = vmul.f32 %v480, %v482
      %v492 = vsel %vm328, %v484, 0.0
      %v493 = vrot.slane %v492, 4
      %v494 = vadd.f32 %v492, %v493
      %v495 = vrot.slane %v494, 2
      %v496 = vadd.f32 %v494, %v495
      %v497 = vrot.slane %v496, 1
      %v498 = vadd.f32 %v496, %v497
      %v499 = vsel %vm328, %v485, 0.0
      %v500 = vrot.slane %v499, 4
      %v501 = vadd.f32 %v499, %v500
      %v502 = vrot.slane %v501, 2
      %v503 = vadd.f32 %v501, %v502
      %v504 = vrot.slane %v503, 1
      %v505 = vadd.f32 %v503, %v504
      %v506 = vsel %vm328, %v486, 0.0
      %v507 = vrot.slane %v506, 4
      %v508 = vadd.f32 %v506, %v507
      %v509 = vrot.slane %v508, 2
      %v510 = vadd.f32 %v508, %v509
      %v511 = vrot.slane %v510, 1
      %v512 = vadd.f32 %v510, %v511
      %v513 = vsel %vm328, %v487, 0.0
      %v514 = vrot.slane %v513, 4
      %v515 = vadd.f32 %v513, %v514
      %v516 = vrot.slane %v515, 2
      %v517 = vadd.f32 %v515, %v516
      %v518 = vrot.slane %v517, 1
      %v519 = vadd.f32 %v517, %v518
      %v520 = vsel %vm328, %v488, 0.0
      %v521 = vrot.slane %v520, 4
      %v522 = vadd.f32 %v520, %v521
      %v523 = vrot.slane %v522, 2
      %v524 = vadd.f32 %v522, %v523
      %v525 = vrot.slane %v524, 1
      %v526 = vadd.f32 %v524, %v525
      %v527 = vsel %vm328, %v489, 0.0
      %v528 = vrot.slane %v527, 4
      %v529 = vadd.f32 %v527, %v528
      %v530 = vrot.slane %v529, 2
      %v531 = vadd.f32 %v529, %v530
      %v532 = vrot.slane %v531, 1
      %v533 = vadd.f32 %v531, %v532
      %v534 = vsel %vm328, %v490, 0.0
      %v535 = vrot.slane %v534, 4
      %v536 = vadd.f32 %v534, %v535
      %v537 = vrot.slane %v536, 2
      %v538 = vadd.f32 %v536, %v537
      %v539 = vrot.slane %v538, 1
      %v540 = vadd.f32 %v538, %v539
      %v541 = vsel %vm328, %v491, 0.0
      %v542 = vrot.slane %v541, 4
      %v543 = vadd.f32 %v541, %v542
      %v544 = vrot.slane %v543, 2
      %v545 = vadd.f32 %v543, %v544
      %v546 = vrot.slane %v545, 1
      %v547 = vadd.f32 %v545, %v546
      %vm556 = vcmask 1041409
      %v557 = vsel %vm556, %v505, %v498
      %vm558 = vcmask 1042434
      %v559 = vsel %vm558, %v512, %v557
      %vm560 = vcmask 1043459
      %v561 = vsel %vm560, %v519, %v559
      %vm562 = vcmask 1044484
      %v563 = vsel %vm562, %v526, %v561
      %vm564 = vcmask 1045509
      %v565 = vsel %vm564, %v533, %v563
      %vm566 = vcmask 1046534
      %v567 = vsel %vm566, %v540, %v565
      %vm568 = vcmask 1047559
      %v569 = vsel %vm568, %v547, %v567
      %v570 = vsel %vm328, %v569, 0
      %572 = vmatprep.subr.mxu0 0.0
      %573 = vmatpush1.msra.mxu0 %v141
      %574 = vmatprep.subr.mxu0 0.0
      %575 = vmatpush1.msra.mxu0 0.0
      %576 = vmatprep.subr.mxu0 0.0
      %577 = vmatpush1.msra.mxu0 0.0
      %578 = vmatprep.subr.mxu0 0.0
      %579 = vmatpush1.msra.mxu0 0.0
      %580 = vmatprep.subr.mxu0 0.0
      %581 = vmatpush1.msra.mxu0 0.0
      %582 = vmatprep.subr.mxu0 0.0
      %583 = vmatpush1.msra.mxu0 0.0
      %584 = vmatprep.subr.mxu0 0.0
      %585 = vmatpush1.msra.mxu0 0.0
      %586 = vmatprep.subr.mxu0 0.0
      %587 = vmatpush1.msra.mxu0 0.0
      %588 = vmatprep.subr.mxu0 0.0
      %589 = vmatpush1.msra.mxu0 0.0
      %590 = vmatprep.subr.mxu0 0.0
      %591 = vmatpush1.msra.mxu0 0.0
      %592 = vmatprep.subr.mxu0 0.0
      %593 = vmatpush1.msra.mxu0 0.0
      %594 = vmatprep.subr.mxu0 0.0
      %595 = vmatpush1.msra.mxu0 0.0
      %596 = vmatprep.subr.mxu0 0.0
      %597 = vmatpush1.msra.mxu0 0.0
      %598 = vmatprep.subr.mxu0 0.0
      %599 = vmatpush1.msra.mxu0 0.0
      %600 = vmatprep.subr.mxu0 0.0
      %601 = vmatpush1.msra.mxu0 0.0
      %602 = vmatprep.subr.mxu0 0.0
      %603 = vmatpush1.msra.mxu0 0.0
      %604 = vmatprep.subr.mxu0 0.0
      %605 = vmatpush1.msra.mxu0 0.0
      %606 = vmatprep.subr.mxu0 0.0
      %607 = vmatpush1.msra.mxu0 0.0
      %608 = vmatprep.subr.mxu0 0.0
      %609 = vmatpush1.msra.mxu0 0.0
      %610 = vmatprep.subr.mxu0 0.0
      %611 = vmatpush1.msra.mxu0 0.0
      %612 = vmatprep.subr.mxu0 0.0
      %613 = vmatpush1.msra.mxu0 0.0
      %614 = vmatprep.subr.mxu0 0.0
      %615 = vmatpush1.msra.mxu0 0.0
      %616 = vmatprep.subr.mxu0 0.0
      %617 = vmatpush1.msra.mxu0 0.0
      %618 = vmatprep.subr.mxu0 0.0
      %619 = vmatpush1.msra.mxu0 0.0
      %620 = vmatprep.subr.mxu0 0.0
      %621 = vmatpush1.msra.mxu0 0.0
      %622 = vmatprep.subr.mxu0 0.0
      %623 = vmatpush1.msra.mxu0 0.0
      %624 = vmatprep.subr.mxu0 0.0
      %625 = vmatpush1.msra.mxu0 0.0
      %626 = vmatprep.subr.mxu0 0.0
      %627 = vmatpush1.msra.mxu0 0.0
      %628 = vmatprep.subr.mxu0 0.0
      %629 = vmatpush1.msra.mxu0 0.0
      %630 = vmatprep.subr.mxu0 0.0
      %631 = vmatpush1.msra.mxu0 0.0
      %632 = vmatprep.subr.mxu0 0.0
      %633 = vmatpush1.msra.mxu0 0.0
      %634 = vmatprep.subr.mxu0 0.0
      %635 = vmatpush1.msra.mxu0 0.0
      %636 = vmatprep.mubr.f32.mxu0 0.0
      %637 = vmatmul.mubr.f32.gmra.mrb[0].mxu0 %v570
      %v638 = vpop.f32.mrb[0].mxu0
      %v639 = vadd.f32 0.0, %v638
      %v640 = vpop.f32.mrb[0].mxu0
      %641 = vdwg.mxu0
      %v642 = vadd.f32 %v148, %v639
      %v643 = vlaneseq
      %v644 = vshrl.u32 %v643, 7
      %v645 = vsub.s32 0, %v644
      %v646 = vrot.slane %v142, %v645
      %v647 = vadd.f32 %v642, %v646
      %v649 = vsel %vm149, %v647, 0
      %v652 = vsel %vm153, %v144, 0
      %654 = vmatprep.subr.mxu0 0.0
      %655 = vmatpush1.msra.mxu0 %v143
      %656 = vmatprep.subr.mxu0 0.0
      %657 = vmatpush1.msra.mxu0 %v652
      %658 = vmatprep.subr.mxu0 0.0
      %659 = vmatpush1.msra.mxu0 0.0
      %660 = vmatprep.subr.mxu0 0.0
      %661 = vmatpush1.msra.mxu0 0.0
      %662 = vmatprep.subr.mxu0 0.0
      %663 = vmatpush1.msra.mxu0 0.0
      %664 = vmatprep.subr.mxu0 0.0
      %665 = vmatpush1.msra.mxu0 0.0
      %666 = vmatprep.subr.mxu0 0.0
      %667 = vmatpush1.msra.mxu0 0.0
      %668 = vmatprep.subr.mxu0 0.0
      %669 = vmatpush1.msra.mxu0 0.0
      %670 = vmatprep.subr.mxu0 0.0
      %671 = vmatpush1.msra.mxu0 0.0
      %672 = vmatprep.subr.mxu0 0.0
      %673 = vmatpush1.msra.mxu0 0.0
      %674 = vmatprep.subr.mxu0 0.0
      %675 = vmatpush1.msra.mxu0 0.0
      %676 = vmatprep.subr.mxu0 0.0
      %677 = vmatpush1.msra.mxu0 0.0
      %678 = vmatprep.subr.mxu0 0.0
      %679 = vmatpush1.msra.mxu0 0.0
      %680 = vmatprep.subr.mxu0 0.0
      %681 = vmatpush1.msra.mxu0 0.0
      %682 = vmatprep.subr.mxu0 0.0
      %683 = vmatpush1.msra.mxu0 0.0
      %684 = vmatprep.subr.mxu0 0.0
      %685 = vmatpush1.msra.mxu0 0.0
      %686 = vmatprep.subr.mxu0 0.0
      %687 = vmatpush1.msra.mxu0 0.0
      %688 = vmatprep.subr.mxu0 0.0
      %689 = vmatpush1.msra.mxu0 0.0
      %690 = vmatprep.subr.mxu0 0.0
      %691 = vmatpush1.msra.mxu0 0.0
      %692 = vmatprep.subr.mxu0 0.0
      %693 = vmatpush1.msra.mxu0 0.0
      %694 = vmatprep.subr.mxu0 0.0
      %695 = vmatpush1.msra.mxu0 0.0
      %696 = vmatprep.subr.mxu0 0.0
      %697 = vmatpush1.msra.mxu0 0.0
      %698 = vmatprep.subr.mxu0 0.0
      %699 = vmatpush1.msra.mxu0 0.0
      %700 = vmatprep.subr.mxu0 0.0
      %701 = vmatpush1.msra.mxu0 0.0
      %702 = vmatprep.subr.mxu0 0.0
      %703 = vmatpush1.msra.mxu0 0.0
      %704 = vmatprep.subr.mxu0 0.0
      %705 = vmatpush1.msra.mxu0 0.0
      %706 = vmatprep.subr.mxu0 0.0
      %707 = vmatpush1.msra.mxu0 0.0
      %708 = vmatprep.subr.mxu0 0.0
      %709 = vmatpush1.msra.mxu0 0.0
      %710 = vmatprep.subr.mxu0 0.0
      %711 = vmatpush1.msra.mxu0 0.0
      %712 = vmatprep.subr.mxu0 0.0
      %713 = vmatpush1.msra.mxu0 0.0
      %714 = vmatprep.subr.mxu0 0.0
      %715 = vmatpush1.msra.mxu0 0.0
      %716 = vmatprep.subr.mxu0 0.0
      %717 = vmatpush1.msra.mxu0 0.0
      %718 = vmatprep.mubr.f32.mxu0 0.0
      %719 = vmatmul.mubr.f32.gmra.mrb[0].mxu0 %v649
      %v720 = vpop.f32.mrb[0].mxu0
      %v721 = vadd.f32 0.0, %v720
      %v722 = vpop.f32.mrb[0].mxu0
      %723 = vdwg.mxu0
      %vm724 = vcmask 138240
      %v726 = vsel %vm724, %v721, 0
      %v729 = vsel %vm153, %v147, 0
      %731 = vmatprep.subr.mxu0 0.0
      %732 = vmatpush1.msra.mxu0 %v145
      %733 = vmatprep.subr.mxu0 0.0
      %734 = vmatpush1.msra.mxu0 %v146
      %735 = vmatprep.subr.mxu0 0.0
      %736 = vmatpush1.msra.mxu0 %v729
      %737 = vmatprep.subr.mxu0 0.0
      %738 = vmatpush1.msra.mxu0 0.0
      %739 = vmatprep.subr.mxu0 0.0
      %740 = vmatpush1.msra.mxu0 0.0
      %741 = vmatprep.subr.mxu0 0.0
      %742 = vmatpush1.msra.mxu0 0.0
      %743 = vmatprep.subr.mxu0 0.0
      %744 = vmatpush1.msra.mxu0 0.0
      %745 = vmatprep.subr.mxu0 0.0
      %746 = vmatpush1.msra.mxu0 0.0
      %747 = vmatprep.subr.mxu0 0.0
      %748 = vmatpush1.msra.mxu0 0.0
      %749 = vmatprep.subr.mxu0 0.0
      %750 = vmatpush1.msra.mxu0 0.0
      %751 = vmatprep.subr.mxu0 0.0
      %752 = vmatpush1.msra.mxu0 0.0
      %753 = vmatprep.subr.mxu0 0.0
      %754 = vmatpush1.msra.mxu0 0.0
      %755 = vmatprep.subr.mxu0 0.0
      %756 = vmatpush1.msra.mxu0 0.0
      %757 = vmatprep.subr.mxu0 0.0
      %758 = vmatpush1.msra.mxu0 0.0
      %759 = vmatprep.subr.mxu0 0.0
      %760 = vmatpush1.msra.mxu0 0.0
      %761 = vmatprep.subr.mxu0 0.0
      %762 = vmatpush1.msra.mxu0 0.0
      %763 = vmatprep.subr.mxu0 0.0
      %764 = vmatpush1.msra.mxu0 0.0
      %765 = vmatprep.subr.mxu0 0.0
      %766 = vmatpush1.msra.mxu0 0.0
      %767 = vmatprep.subr.mxu0 0.0
      %768 = vmatpush1.msra.mxu0 0.0
      %769 = vmatprep.subr.mxu0 0.0
      %770 = vmatpush1.msra.mxu0 0.0
      %771 = vmatprep.subr.mxu0 0.0
      %772 = vmatpush1.msra.mxu0 0.0
      %773 = vmatprep.subr.mxu0 0.0
      %774 = vmatpush1.msra.mxu0 0.0
      %775 = vmatprep.subr.mxu0 0.0
      %776 = vmatpush1.msra.mxu0 0.0
      %777 = vmatprep.subr.mxu0 0.0
      %778 = vmatpush1.msra.mxu0 0.0
      %779 = vmatprep.subr.mxu0 0.0
      %780 = vmatpush1.msra.mxu0 0.0
      %781 = vmatprep.subr.mxu0 0.0
      %782 = vmatpush1.msra.mxu0 0.0
      %783 = vmatprep.subr.mxu0 0.0
      %784 = vmatpush1.msra.mxu0 0.0
      %785 = vmatprep.subr.mxu0 0.0
      %786 = vmatpush1.msra.mxu0 0.0
      %787 = vmatprep.subr.mxu0 0.0
      %788 = vmatpush1.msra.mxu0 0.0
      %789 = vmatprep.subr.mxu0 0.0
      %790 = vmatpush1.msra.mxu0 0.0
      %791 = vmatprep.subr.mxu0 0.0
      %792 = vmatpush1.msra.mxu0 0.0
      %793 = vmatprep.subr.mxu0 0.0
      %794 = vmatpush1.msra.mxu0 0.0
      %795 = vmatprep.mubr.f32.mxu0 0.0
      %796 = vmatmul.mubr.f32.gmra.mrb[0].mxu0 %v726
      %v797 = vpop.f32.mrb[0].mxu0
      %v798 = vadd.f32 0.0, %v797
      %v799 = vpop.f32.mrb[0].mxu0
      %800 = vdwg.mxu0
      %v801 = vadd.f32 %v647, %v798
      %802 = vst.msk [vmem:[%s138] sm:$0xff] %vm328, %v801
      %p803 = scmp.lt.s32.totalorder %s13, 1
      %s804 = scalar_select %p803, %s13, 1
      %s805 = smul.addr %s804, 8
      %s806 = scalar_lea.vmem %s2, %s805
      // Predicated region
      $region29: #{encoder_layer_forward.1} parent=27 // pred_check
        %p807 = pneg %p78
      $region30: #{encoder_layer_forward.1} parent=27 // pred_check_branch
        %809 = sbr.rel (%p807) target = $region32
      $region31: #{encoder_layer_forward.1} parent=27 // pred_region
        _
      $region32: #{encoder_layer_forward.1} parent=27 // pred_fallthru
        _
    $region28: #{encoder_layer_forward.1} parent=5 // pred_fallthru
      _
    %p810 = scmp.le.s32.totalorder 2, %s8
    // Predicated region
    $region33: #{encoder_layer_forward.1} parent=5 // pred_check
      %p811 = pneg %p810
    $region34: #{encoder_layer_forward.1} parent=5 // pred_check_branch
      %813 = sbr.rel (%p811) target = $region36
    $region35: #{encoder_layer_forward.1} parent=5 // pred_region
      %s814 = ssub.s32 %s8, 2
      // Predicated region
      $region37: #{encoder_layer_forward.1} parent=35 // pred_check
        %p815 = pneg %p84
      $region38: #{encoder_layer_forward.1} parent=35 // pred_check_branch
        %817 = sbr.rel (%p815) target = $region40
      $region39: #{encoder_layer_forward.1} parent=35 // pred_region
        %p818 = scmp.lt.s32.totalorder %s14, 1
        %s819 = scalar_select %p818, %s14, 1
        %s820 = smul.addr %s819, 8
        %s821 = scalar_lea.vmem %s2, %s820
      $region40: #{encoder_layer_forward.1} parent=35 // pred_fallthru
        _
    $region36: #{encoder_layer_forward.1} parent=5 // pred_fallthru
      _
  $region6: #{encoder_layer_forward.1} parent=0 // loop_footer
    %s12 = sadd.s32 1, %s8
  $region7: #{encoder_layer_forward.1} parent=0 // loop_footer_branch
    %7 = sbr.rel target = $region3
  $region8: #{encoder_layer_forward.1} parent=0 // loop_exit
    _

</llo_original>
